<compile_context>
chip_gen: v6e
topology: v6e:2x2x1
jax: 0.10.0
libtpu: 0.0.40
codegen_flags: <defaults>
</compile_context>

<pallas_src>
import jax
import jax.numpy as jnp
from jax.experimental import pallas as pl
from jax.experimental.pallas import tpu as pltpu

_LANE_WIDTH = 1024                 # large multiple of 128 -> unmasked, lane-dense vst
_TARGET_TILE_BYTES = 4 * 1024 * 1024   # 4 MiB tile; 2 arrays x 2 buffers = 16 MiB resident
_VMEM_LIMIT_BYTES = 32 * 1024 * 1024   # safe on v5e/v6e (128 MiB) and v7x (64 MiB physical)


def _starrelu_kernel(scale_ref, bias_ref, x_ref, o_ref):
    # scale_ref / bias_ref are (1,) scalars in SMEM
    s = scale_ref[0]
    b = bias_ref[0]
    x = x_ref[...]
    r = jnp.maximum(x, jnp.zeros((), x.dtype))
    # s/b are f32, so low-precision inputs are promoted to f32 for the math
    o_ref[...] = (s * (r * r) + b).astype(o_ref.dtype)


def star_relu(x, scale, bias):
    """x: any-rank array; scale/bias: shape (1,). Returns same shape/dtype as x."""
    orig_shape = x.shape
    n = x.size

    # ---- lane-dense flatten + pad so every row is (8,128)-aligned ----
    L = _LANE_WIDTH
    padded = pl.cdiv(n, 8 * L) * 8 * L
    flat = x.reshape(-1)
    if padded != n:
        flat = jnp.pad(flat, (0, padded - n))
    rows = padded // L
    x2d = flat.reshape(rows, L)

    # ---- pick a multi-MiB row tile (multiple of 8 sublanes) ----
    itemsize = jnp.dtype(x.dtype).itemsize
    bytes_per_row = L * itemsize
    tm = (_TARGET_TILE_BYTES // bytes_per_row) // 8 * 8
    tm = max(8, min(tm, rows))

    # v7x has 2 TensorCores: keep the parallel grid >= 2 tiles when there is
    # enough work, so both cores get a share.
    if pl.cdiv(rows, tm) < 2 and rows >= 16:
        tm = max(8, ((rows + 1) // 2 + 7) // 8 * 8)
    grid = (pl.cdiv(rows, tm),)

    out = pl.pallas_call(
        _starrelu_kernel,
        out_shape=jax.ShapeDtypeStruct((rows, L), x.dtype),
        grid_spec=pltpu.PrefetchScalarGridSpec(
            num_scalar_prefetch=0,
            grid=grid,
            in_specs=[
                pl.BlockSpec(memory_space=pltpu.MemorySpace.SMEM),  # scale (1,)
                pl.BlockSpec(memory_space=pltpu.MemorySpace.SMEM),  # bias  (1,)
                pl.BlockSpec((tm, L), lambda i: (i, 0)),            # x tile
            ],
            out_specs=pl.BlockSpec((tm, L), lambda i: (i, 0)),
        ),
        compiler_params=pltpu.CompilerParams(
            dimension_semantics=("parallel",),
            vmem_limit_bytes=_VMEM_LIMIT_BYTES,
        ),
    )(scale, bias, x2d)

    # slice away the padding and restore the original shape
    return out.reshape(-1)[:n].reshape(orig_shape)


if __name__ == "__main__":
    key = jax.random.PRNGKey(0)

    # StarReLU.__init__ defaults: scale = 1.0 * ones(1), bias = 0.0 * ones(1)
    scale_value, bias_value = 1.0, 0.0
    scale = scale_value * jnp.ones((1,), dtype=jnp.float32)
    bias = bias_value * jnp.ones((1,), dtype=jnp.float32)

    # Small example input, NHWC layout: batch=2, spatial=16x16, channels=4
    x = jax.random.normal(key, (2, 16, 16, 4), dtype=jnp.float32)

    y = star_relu(x, scale, bias)
    y = jax.block_until_ready(y)

    ref = scale[0] * jnp.maximum(x, 0.0) ** 2 + bias[0]
    assert y.shape == x.shape and y.dtype == x.dtype
    assert jnp.allclose(y, ref, atol=1e-6), "mismatch vs reference"

    # second check exercising a multi-tile (>=2 grid steps) path
    k2 = jax.random.PRNGKey(1)
    x2 = jax.random.normal(k2, (4, 32, 32, 64), dtype=jnp.float32)
    y2 = jax.block_until_ready(star_relu(x2, scale, bias))
    ref2 = scale[0] * jnp.maximum(x2, 0.0) ** 2 + bias[0]
    assert jnp.allclose(y2, ref2, atol=1e-6), "mismatch vs reference (multi-tile)"

    print("KERNEL_OK")
</pallas_src>

<mosaic_0001>
module attributes {stable_mosaic.version = 11 : i64} {
  func.func @_starrelu_kernel(%arg0: i32, %arg1: memref<1xf32, #tpu.memory_space<smem>>, %arg2: memref<1xf32, #tpu.memory_space<smem>>, %arg3: memref<8x1024xf32, #tpu.memory_space<vmem>>, %arg4: memref<8x1024xf32, #tpu.memory_space<vmem>>) attributes {dimension_semantics = [#tpu.dimension_semantics<parallel>], iteration_bounds = array<i64: 1>, scalar_prefetch = 0 : i64, scratch_operands = 0 : i64, tpu.core_type = #tpu.core_type<tc>, window_params = [{transform_indices = @transform_0, window_bounds = array<i64: 1>}, {transform_indices = @transform_1, window_bounds = array<i64: 1>}, {transform_indices = @transform_2, window_bounds = array<i64: 8, 1024>}, {transform_indices = @transform_3, window_bounds = array<i64: 8, 1024>}]} {
    %c0 = arith.constant 0 : index
    %0 = memref.load %arg1[%c0] : memref<1xf32, #tpu.memory_space<smem>>
    %c0_0 = arith.constant 0 : index
    %1 = memref.load %arg2[%c0_0] : memref<1xf32, #tpu.memory_space<smem>>
    %c0_1 = arith.constant 0 : index
    %c0_2 = arith.constant 0 : index
    %2 = vector.load %arg3[%c0_1, %c0_2] : memref<8x1024xf32, #tpu.memory_space<vmem>>, vector<8x1024xf32>
    %cst = arith.constant 0.000000e+00 : f32
    %3 = vector.broadcast %cst : f32 to vector<8x1024xf32>
    %4 = arith.maximumf %2, %3 : vector<8x1024xf32>
    %5 = arith.mulf %4, %4 : vector<8x1024xf32>
    %6 = vector.broadcast %0 : f32 to vector<8x1024xf32>
    %7 = arith.mulf %6, %5 : vector<8x1024xf32>
    %8 = vector.broadcast %1 : f32 to vector<8x1024xf32>
    %9 = arith.addf %7, %8 : vector<8x1024xf32>
    %c0_3 = arith.constant 0 : index
    %c0_4 = arith.constant 0 : index
    %10 = vector.load %arg4[%c0_3, %c0_4] : memref<8x1024xf32, #tpu.memory_space<vmem>>, vector<8x1024xf32>
    tpu.vector_store %arg4[%c0_3, %c0_4], %9 {strides = array<i32>} : memref<8x1024xf32, #tpu.memory_space<vmem>>, vector<8x1024xf32>,
    return
  }
  func.func @transform_0(%arg0: i32) -> i32 {
    %c0_i32 = arith.constant 0 : i32
    %c0_i32_0 = arith.constant 0 : i32
    return %c0_i32 : i32
  }
  func.func @transform_1(%arg0: i32) -> i32 {
    %c0_i32 = arith.constant 0 : i32
    %c0_i32_0 = arith.constant 0 : i32
    return %c0_i32 : i32
  }
  func.func @transform_2(%arg0: i32) -> (i32, i32) {
    %c0_i32 = arith.constant 0 : i32
    %c0_i32_0 = arith.constant 0 : i32
    return %arg0, %c0_i32 : i32, i32
  }
  func.func @transform_3(%arg0: i32) -> (i32, i32) {
    %c0_i32 = arith.constant 0 : i32
    %c0_i32_0 = arith.constant 0 : i32
    return %arg0, %c0_i32 : i32, i32
  }
}

</mosaic_0001>

<llo_original>
// kernel: tpu_custom_call.1
$region0: #{tpu_custom_call.1}
  #allocation0 [shape = 'u32[]', space=smem, size = 0x4, offset = 0x4, fixed_abs, tag = 'smem constant byte address 0x4 - core index']
  #allocation1 [shape = 'u32[144,128]{1,0:T(1,128)}', space=vmem, size = 0x12000, scoped, tag = 'internal scratch']
  #allocation2 [shape = 'f32[1]{0:T(128)S(6)}', space=smem, size = 0x200, scoped, tag = 'scoped memory for tpu_custom_call.1']
  #allocation3 [shape = 'f32[1]{0:T(128)S(6)}', space=smem, size = 0x200, scoped, tag = 'scoped memory for tpu_custom_call.1']
  %s0 = inlined_call_operand.<no memory space> [shape: f32[1], index: 0, kind: input, shape index: {}]
  %s1 = inlined_call_operand.<no memory space> [shape: f32[1], index: 1, kind: input, shape index: {}]
  %s2 = inlined_call_operand.hbm [shape: f32[8,1024], index: 2, kind: input, shape index: {}]
  %s3 = inlined_call_operand.hbm [shape: f32[8,1024], index: 3, kind: output, shape index: {}]
  %s4 = sld [smem:[#allocation0]]
  $region26: #{tpu_custom_call.1} parent=0
    _
  %s6 = ssub.s32 1, %s4
  %s7 = scalar_select 0, %s6, %s4
  %8 = sst [smem:[#allocation2]] %s0
  %9 = sst [smem:[#allocation3]] %s1
  $region1: #{tpu_custom_call.1} parent=0
    #allocation4 [shape = 'u8[32768]{0}', space=vmem, size = 0x8000, scoped, tag = 'input window, operand 2, single buffered']
    #allocation5 [shape = 's32[1]{0}', space=sflag, size = 0x4, scoped, tag = 'scoped memory for tpu_custom_call.1']
    #allocation6 [shape = 's32[1]{0}', space=sflag, size = 0x4, scoped, tag = 'scoped memory for tpu_custom_call.1']
    #allocation7 [shape = 'u8[32768]{0}', space=vmem, size = 0x8000, scoped, tag = 'output window, operand 0, single buffered']
    %10 = vsyncpa [#allocation5], 0
    %11 = vsyncpa [#allocation6], 0
    // Predicated region
    $region2: #{tpu_custom_call.1} parent=1 // pred_check
      _
    $region3: #{tpu_custom_call.1} parent=1 // pred_check_branch
      %13 = sbr.rel (0) target = $region5
    $region4: #{tpu_custom_call.1} parent=1 // pred_region
      _
    $region5: #{tpu_custom_call.1} parent=1 // pred_fallthru
      _
    // Predicated region
    $region6: #{tpu_custom_call.1} parent=1 // pred_check
      _
    $region7: #{tpu_custom_call.1} parent=1 // pred_check_branch
      %15 = sbr.rel (0) target = $region9
    $region8: #{tpu_custom_call.1} parent=1 // pred_region
      _
    $region9: #{tpu_custom_call.1} parent=1 // pred_fallthru
      _
    // Predicated region
    $region10: #{tpu_custom_call.1} parent=1 // pred_check
      _
    $region11: #{tpu_custom_call.1} parent=1 // pred_check_branch
      %17 = sbr.rel (0) target = $region13
    $region12: #{tpu_custom_call.1} parent=1 // pred_region
      %s19 = ssub.s32 1024, 1024
      %20 = vsyncadd [#allocation5], %s19
      %s22 = sshll.u32 [#allocation4], 4
      %s23 = int_to_ptr.vmem [resolvable:$true] %s22
      %25 = dma.hbm_to_vmem [thread:$0]  %s2, 1024, %s23, [#allocation5]
    $region13: #{tpu_custom_call.1} parent=1 // pred_fallthru
      _
    // Predicated region
    $region14: #{tpu_custom_call.1} parent=1 // pred_check
      _
    $region15: #{tpu_custom_call.1} parent=1 // pred_check_branch
      %27 = sbr.rel (0) target = $region17
    $region16: #{tpu_custom_call.1} parent=1 // pred_region
      %28 = dma.done [#allocation5], 1024
    $region17: #{tpu_custom_call.1} parent=1 // pred_fallthru
      _
    %s29 = sld [smem:[#allocation2]]
    %s30 = sld [smem:[#allocation3]]
    %v31 = vld [vmem:[#allocation4] sm:$0xff]
    %v32 = vld [vmem:[#allocation4 + $0x8] sm:$0xff]
    %v33 = vld [vmem:[#allocation4 + $0x10] sm:$0xff]
    %v34 = vld [vmem:[#allocation4 + $0x18] sm:$0xff]
    %v35 = vld [vmem:[#allocation4 + $0x20] sm:$0xff]
    %v36 = vld [vmem:[#allocation4 + $0x28] sm:$0xff]
    %v37 = vld [vmem:[#allocation4 + $0x30] sm:$0xff]
    %v38 = vld [vmem:[#allocation4 + $0x38] sm:$0xff]
    %v39 = vmax.f32 %v31, 0.0
    %v40 = vmax.f32 %v32, 0.0
    %v41 = vmax.f32 %v33, 0.0
    %v42 = vmax.f32 %v34, 0.0
    %v43 = vmax.f32 %v35, 0.0
    %v44 = vmax.f32 %v36, 0.0
    %v45 = vmax.f32 %v37, 0.0
    %v46 = vmax.f32 %v38, 0.0
    %v47 = vmul.f32 %v39, %v39
    %v48 = vmul.f32 %v40, %v40
    %v49 = vmul.f32 %v41, %v41
    %v50 = vmul.f32 %v42, %v42
    %v51 = vmul.f32 %v43, %v43
    %v52 = vmul.f32 %v44, %v44
    %v53 = vmul.f32 %v45, %v45
    %v54 = vmul.f32 %v46, %v46
    %v55 = vstv %s29
    %v56 = vmul.f32 %v55, %v47
    %v57 = vmul.f32 %v55, %v48
    %v58 = vmul.f32 %v55, %v49
    %v59 = vmul.f32 %v55, %v50
    %v60 = vmul.f32 %v55, %v51
    %v61 = vmul.f32 %v55, %v52
    %v62 = vmul.f32 %v55, %v53
    %v63 = vmul.f32 %v55, %v54
    %v64 = vstv %s30
    %v65 = vadd.f32 %v56, %v64
    %v66 = vadd.f32 %v57, %v64
    %v67 = vadd.f32 %v58, %v64
    %v68 = vadd.f32 %v59, %v64
    %v69 = vadd.f32 %v60, %v64
    %v70 = vadd.f32 %v61, %v64
    %v71 = vadd.f32 %v62, %v64
    %v72 = vadd.f32 %v63, %v64
    %73 = vst [vmem:[#allocation7] sm:$0xff] %v65
    %74 = vst [vmem:[#allocation7 + $0x8] sm:$0xff] %v66
    %75 = vst [vmem:[#allocation7 + $0x10] sm:$0xff] %v67
    %76 = vst [vmem:[#allocation7 + $0x18] sm:$0xff] %v68
    %77 = vst [vmem:[#allocation7 + $0x20] sm:$0xff] %v69
    %78 = vst [vmem:[#allocation7 + $0x28] sm:$0xff] %v70
    %79 = vst [vmem:[#allocation7 + $0x30] sm:$0xff] %v71
    %80 = vst [vmem:[#allocation7 + $0x38] sm:$0xff] %v72
    // Predicated region
    $region18: #{tpu_custom_call.1} parent=1 // pred_check
      _
    $region19: #{tpu_custom_call.1} parent=1 // pred_check_branch
      %82 = sbr.rel (0) target = $region21
    $region20: #{tpu_custom_call.1} parent=1 // pred_region
      %s84 = ssub.s32 1024, 1024
      %85 = vsyncadd [#allocation6], %s84
      %s87 = sshll.u32 [#allocation7], 4
      %s88 = int_to_ptr.vmem [resolvable:$true] %s87
      %90 = dma.vmem_to_hbm [thread:$0]  %s88, 1024, %s3, [#allocation6]
    $region21: #{tpu_custom_call.1} parent=1 // pred_fallthru
      _
    // Predicated region
    $region22: #{tpu_custom_call.1} parent=1 // pred_check
      _
    $region23: #{tpu_custom_call.1} parent=1 // pred_check_branch
      %92 = sbr.rel (0) target = $region25
    $region24: #{tpu_custom_call.1} parent=1 // pred_region
      %93 = dma.done [#allocation6], 1024
    $region25: #{tpu_custom_call.1} parent=1 // pred_fallthru
      _
    %94 = vsyncpa [#allocation5], 1
    %95 = vsyncpa [#allocation6], 1

</llo_original>
